<compile_context>
chip_gen: v6e
topology: v6e:2x2x1
jax: 0.10.0
libtpu: 0.0.40
codegen_flags: <defaults>
</compile_context>

<pallas_src>
import functools

import jax
import jax.numpy as jnp
from jax import lax
from jax.experimental import pallas as pl
from jax.experimental.pallas import tpu as pltpu

_LANE = 128
_NUM_CORES = 2                      # leading "parallel" grid axis (v7x 2-TC split)
_BYTES_PER_BUF = 2 * 1024 * 1024    # ~2 MiB per streaming buffer


def _round_up(x, m):
    return ((x + m - 1) // m) * m


def _sq_err_kernel(recon_ref, target_ref, acc_ref, *, rows, tile_rows,
                   tiles_per_core, acc_sub, needs_mask):
    """Streaming sum((recon - target)^2) into a per-core resident accumulator block."""
    c = pl.program_id(0)   # "parallel" axis (distinct TensorCore on v7x)
    i = pl.program_id(1)   # "arbitrary" streaming axis

    @pl.when(i == 0)
    def _():
        acc_ref[...] = jnp.zeros_like(acc_ref)

    diff = recon_ref[...].astype(jnp.float32) - target_ref[...].astype(jnp.float32)
    sq = diff * diff

    if needs_mask:
        # Ragged last tile / over-covering (clamped) tiles: zero rows whose
        # global row index is outside the real array. `rows` is trace-time static.
        tile_start = (c * tiles_per_core + i) * tile_rows
        row_ids = tile_start + lax.broadcasted_iota(jnp.int32, (tile_rows, 1), 0)
        sq = jnp.where(row_ids < rows, sq, 0.0)

    # (tile_rows, 128) -> (tile_rows//acc_sub, acc_sub, 128) is a leading-dim
    # split (layout preserving, no VMEM materialization); the axis-0 sum is
    # pure VALU work with acc_sub//8 independent vreg add chains, keeping the
    # steady state DMA-bound even at v7x per-core HBM bandwidth.
    acc_ref[...] += jnp.sum(sq.reshape(-1, acc_sub, _LANE), axis=0, keepdims=True)


def vae_loss(mu, logvar, recon_x, target_x, *, beta=1.0):
    """Pallas implementation of VAELoss(recon_mode='l2', beta=beta).forward."""
    B = mu.shape[0]
    assert logvar.shape == mu.shape
    assert recon_x.shape == target_x.shape and recon_x.shape[0] == B

    # ---- KLD term: O(B*Z), trivially cheap -> plain JAX (per perf review;
    #      keeps the kernel a pure streaming reduction and VMEM-safe on v7x).
    mu32 = mu.astype(jnp.float32)
    lv32 = logvar.astype(jnp.float32)
    kld_loss = jnp.mean(-0.5 * jnp.sum(1.0 + lv32 - mu32 * mu32 - jnp.exp(lv32), axis=1))

    # ---- reconstruction term (streamed through the Pallas kernel) ----------
    n_elems = 1
    for d in recon_x.shape:
        n_elems *= int(d)
    rows = n_elems // _LANE
    tail = n_elems - rows * _LANE

    recon_flat = recon_x.reshape(-1)
    target_flat = target_x.reshape(-1)

    tail_sum = jnp.float32(0.0)
    if tail:
        # <128 ragged elements: summed in plain JAX (tiny read), so the kernel
        # never needs a wrapper-side jnp.pad of the full tensors.
        rt = recon_flat[rows * _LANE:].astype(jnp.float32)
        tt = target_flat[rows * _LANE:].astype(jnp.float32)
        tail_sum = jnp.sum((rt - tt) ** 2)

    if rows == 0:
        recon_sum = tail_sum
    else:
        itemsize = recon_x.dtype.itemsize
        # dtype-aware sublane packing: f32 -> 8, bf16 -> 16, int8/fp8 -> 32 rows.
        sub_mult = {4: 8, 2: 16, 1: 32}.get(itemsize, 8)
        max_tile_rows = _BYTES_PER_BUF // (_LANE * itemsize)
        tile_rows = min(max_tile_rows, _round_up(rows, sub_mult))

        # widest accumulator block that still divides the tile rows
        acc_sub = 32 if tile_rows % 32 == 0 else (16 if tile_rows % 16 == 0 else 8)

        n_tiles = pl.cdiv(rows, tile_rows)
        tiles_per_core = pl.cdiv(n_tiles, _NUM_CORES)
        needs_mask = (rows % tile_rows != 0) or (n_tiles != _NUM_CORES * tiles_per_core)

        if tail:
            # 128-aligned prefix (rare path for image tensors; may cost one copy).
            recon_flat = recon_flat[: rows * _LANE]
            target_flat = target_flat[: rows * _LANE]
        recon2d = recon_flat.reshape(rows, _LANE)     # bitcast-style reshape, no copy
        target2d = target_flat.reshape(rows, _LANE)

        def data_map(c, i):
            # Clamp so an over-covering step (odd n_tiles / tiny inputs) re-reads
            # the last valid tile; the in-kernel row mask zeroes its contribution.
            return (jnp.minimum(c * tiles_per_core + i, n_tiles - 1), 0)

        kernel = functools.partial(
            _sq_err_kernel, rows=rows, tile_rows=tile_rows,
            tiles_per_core=tiles_per_core, acc_sub=acc_sub, needs_mask=needs_mask)

        partials = pl.pallas_call(
            kernel,
            out_shape=jax.ShapeDtypeStruct((_NUM_CORES, acc_sub, _LANE), jnp.float32),
            grid=(_NUM_CORES, tiles_per_core),
            in_specs=[
                pl.BlockSpec((tile_rows, _LANE), data_map),   # recon tile
                pl.BlockSpec((tile_rows, _LANE), data_map),   # target tile
            ],
            # Each core owns its own (1, acc_sub, 128) accumulator block ->
            # disjoint writeback, no race under the "parallel" axis.
            out_specs=pl.BlockSpec((1, acc_sub, _LANE), lambda c, i: (c, 0, 0)),
            compiler_params=pltpu.CompilerParams(
                dimension_semantics=("parallel", "arbitrary"),
                vmem_limit_bytes=32 * 1024 * 1024,
            ),
            cost_estimate=pl.CostEstimate(
                flops=3 * rows * _LANE,
                transcendentals=0,
                bytes_accessed=2 * rows * _LANE * itemsize
                + _NUM_CORES * acc_sub * _LANE * 4,
            ),
        )(recon2d, target2d)

        # Tiny (2, acc_sub, 128) cross-lane reduce done in plain JAX.
        recon_sum = jnp.sum(partials) + tail_sum

    recon_loss = recon_sum / jnp.float32(B)
    # TODO(synk): other recon modes ('bce', 'l1', 'smoothl1', 'none') not implemented.
    return recon_loss + jnp.float32(beta) * kld_loss


def _vae_loss_ref(mu, logvar, recon_x, target_x, *, beta=1.0):
    # Pure-JAX reference mirroring the PyTorch module (recon_mode='l2').
    recon_loss = jnp.mean(jnp.sum((recon_x - target_x) ** 2, axis=(1, 2, 3)))
    kld_loss = jnp.mean(-0.5 * jnp.sum(1.0 + logvar - mu ** 2 - jnp.exp(logvar), axis=1))
    return recon_loss + beta * kld_loss


if __name__ == "__main__":
    key = jax.random.PRNGKey(0)
    k1, k2, k3, k4 = jax.random.split(key, 4)

    B, Z = 2, 32         # latent: mu/logvar (B, Z)
    C, H, W = 4, 16, 16  # images: NCHW

    mu = jax.random.normal(k1, (B, Z), dtype=jnp.float32)
    logvar = 0.1 * jax.random.normal(k2, (B, Z), dtype=jnp.float32)
    recon_x = jax.random.uniform(k3, (B, C, H, W), dtype=jnp.float32)
    target_x = jax.random.uniform(k4, (B, C, H, W), dtype=jnp.float32)

    loss = vae_loss(mu, logvar, recon_x, target_x, beta=1.0)
    loss = jax.block_until_ready(loss)

    ref = _vae_loss_ref(mu, logvar, recon_x, target_x, beta=1.0)
    assert jnp.allclose(loss, ref, rtol=1e-5, atol=1e-5), (loss, ref)

    print("KERNEL_OK")
</pallas_src>

<mosaic_0001>
module attributes {stable_mosaic.version = 11 : i64} {
  func.func @_sq_err_kernel(%arg0: i32, %arg1: i32, %arg2: memref<16x128xf32, #tpu.memory_space<vmem>>, %arg3: memref<16x128xf32, #tpu.memory_space<vmem>>, %arg4: memref<1x16x128xf32, #tpu.memory_space<vmem>>) attributes {dimension_semantics = [#tpu.dimension_semantics<parallel>, #tpu.dimension_semantics<arbitrary>], iteration_bounds = array<i64: 2, 1>, scalar_prefetch = 0 : i64, scratch_operands = 0 : i64, tpu.core_type = #tpu.core_type<tc>, window_params = [{transform_indices = @transform_0, window_bounds = array<i64: 16, 128>}, {transform_indices = @transform_1, window_bounds = array<i64: 16, 128>}, {transform_indices = @transform_2, window_bounds = array<i64: 1, 16, 128>}]} {
    %c0_i32 = arith.constant 0 : i32
    %0 = arith.cmpi eq, %arg1, %c0_i32 : i32
    %1 = arith.extui %0 : i1 to i32
    %c0_i32_0 = arith.constant 0 : i32
    %2 = arith.cmpi ne, %1, %c0_i32_0 : i32
    scf.if %2 {
      %cst_12 = arith.constant 0.000000e+00 : f32
      %25 = vector.broadcast %cst_12 : f32 to vector<1x16x128xf32>
      %c0_13 = arith.constant 0 : index
      %c0_14 = arith.constant 0 : index
      %c0_15 = arith.constant 0 : index
      %26 = vector.load %arg4[%c0_13, %c0_14, %c0_15] : memref<1x16x128xf32, #tpu.memory_space<vmem>>, vector<1x16x128xf32>
      tpu.vector_store %arg4[%c0_13, %c0_14, %c0_15], %25 {strides = array<i32>} : memref<1x16x128xf32, #tpu.memory_space<vmem>>, vector<1x16x128xf32>,
    } else {
    }
    %c0 = arith.constant 0 : index
    %c0_1 = arith.constant 0 : index
    %3 = vector.load %arg2[%c0, %c0_1] : memref<16x128xf32, #tpu.memory_space<vmem>>, vector<16x128xf32>
    %c0_2 = arith.constant 0 : index
    %c0_3 = arith.constant 0 : index
    %4 = vector.load %arg3[%c0_2, %c0_3] : memref<16x128xf32, #tpu.memory_space<vmem>>, vector<16x128xf32>
    %5 = arith.subf %3, %4 : vector<16x128xf32>
    %6 = arith.mulf %5, %5 : vector<16x128xf32>
    %c1_i32 = arith.constant 1 : i32
    %7 = arith.muli %arg0, %c1_i32 : i32
    %8 = arith.addi %7, %arg1 : i32
    %c16_i32 = arith.constant 16 : i32
    %9 = arith.muli %8, %c16_i32 : i32
    %10 = tpu.iota {dimensions = array<i32: 0>} : vector<16x1xi32>
    %11 = vector.broadcast %9 : i32 to vector<16x1xi32>
    %12 = arith.addi %11, %10 : vector<16x1xi32>
    %c16_i32_4 = arith.constant 16 : i32
    %13 = vector.broadcast %c16_i32_4 : i32 to vector<16x1xi32>
    %14 = arith.cmpi slt, %12, %13 : vector<16x1xi32>
    %cst = arith.constant 0.000000e+00 : f32
    %15 = vector.shape_cast %14 : vector<16x1xi1> to vector<16x1xi1>
    %16 = vector.broadcast %15 : vector<16x1xi1> to vector<16x128xi1>
    %17 = vector.broadcast %cst : f32 to vector<16x128xf32>
    %18 = arith.select %16, %6, %17 : vector<16x128xi1>, vector<16x128xf32>
    %c0_5 = arith.constant 0 : index
    %c0_6 = arith.constant 0 : index
    %c0_7 = arith.constant 0 : index
    %19 = vector.load %arg4[%c0_5, %c0_6, %c0_7] : memref<1x16x128xf32, #tpu.memory_space<vmem>>, vector<1x16x128xf32>
    %20 = vector.shape_cast %18 : vector<16x128xf32> to vector<1x16x128xf32>
    %cst_8 = arith.constant dense<0.000000e+00> : vector<16x128xf32>
    %21 = vector.multi_reduction <add>, %20, %cst_8 [0] : vector<1x16x128xf32> to vector<16x128xf32>
    %22 = vector.shape_cast %21 : vector<16x128xf32> to vector<1x16x128xf32>
    %23 = arith.addf %19, %22 : vector<1x16x128xf32>
    %c0_9 = arith.constant 0 : index
    %c0_10 = arith.constant 0 : index
    %c0_11 = arith.constant 0 : index
    %24 = vector.load %arg4[%c0_9, %c0_10, %c0_11] : memref<1x16x128xf32, #tpu.memory_space<vmem>>, vector<1x16x128xf32>
    tpu.vector_store %arg4[%c0_9, %c0_10, %c0_11], %23 {strides = array<i32>} : memref<1x16x128xf32, #tpu.memory_space<vmem>>, vector<1x16x128xf32>,
    return
  }
  func.func @transform_0(%arg0: i32, %arg1: i32) -> (i32, i32) {
    %c1_i32 = arith.constant 1 : i32
    %0 = arith.muli %arg0, %c1_i32 : i32
    %1 = arith.addi %0, %arg1 : i32
    %c0_i32 = arith.constant 0 : i32
    %2 = arith.minsi %1, %c0_i32 : i32
    %c0_i32_0 = arith.constant 0 : i32
    %c0_i32_1 = arith.constant 0 : i32
    return %2, %c0_i32_0 : i32, i32
  }
  func.func @transform_1(%arg0: i32, %arg1: i32) -> (i32, i32) {
    %c1_i32 = arith.constant 1 : i32
    %0 = arith.muli %arg0, %c1_i32 : i32
    %1 = arith.addi %0, %arg1 : i32
    %c0_i32 = arith.constant 0 : i32
    %2 = arith.minsi %1, %c0_i32 : i32
    %c0_i32_0 = arith.constant 0 : i32
    %c0_i32_1 = arith.constant 0 : i32
    return %2, %c0_i32_0 : i32, i32
  }
  func.func @transform_2(%arg0: i32, %arg1: i32) -> (i32, i32, i32) {
    %c0_i32 = arith.constant 0 : i32
    %c0_i32_0 = arith.constant 0 : i32
    %c0_i32_1 = arith.constant 0 : i32
    return %arg0, %c0_i32, %c0_i32_0 : i32, i32, i32
  }
}

</mosaic_0001>

<llo_original>
// kernel: tpu_custom_call.1
$region0: #{tpu_custom_call.1}
  #allocation0 [shape = 'u32[]', space=smem, size = 0x4, offset = 0x4, fixed_abs, tag = 'smem constant byte address 0x4 - core index']
  #allocation1 [shape = 'u32[144,128]{1,0:T(1,128)}', space=vmem, size = 0x12000, scoped, tag = 'internal scratch']
  %s0 = inlined_call_operand.hbm [shape: f32[16,128], index: 0, kind: input, shape index: {}]
  %s1 = inlined_call_operand.hbm [shape: f32[16,128], index: 1, kind: input, shape index: {}]
  %s2 = inlined_call_operand.hbm [shape: f32[2,16,128], index: 2, kind: output, shape index: {}]
  %s3 = sld [smem:[#allocation0]]
  $region53: #{tpu_custom_call.1} parent=0
    _
  %s5 = ssub.s32 1, %s3
  %s6 = scalar_select 0, %s5, %s3
  $region1: #{tpu_custom_call.1} parent=0
    #allocation2 [shape = 'u8[16384]{0}', space=vmem, size = 0x4000, scoped, tag = 'input window, operand 0']
    #allocation3 [shape = 's32[2]{0}', space=sflag, size = 0x8, scoped, tag = 'scoped memory for tpu_custom_call.1']
    #allocation4 [shape = 's32[2]{0}', space=sflag, size = 0x8, scoped, tag = 'scoped memory for tpu_custom_call.1']
    #allocation5 [shape = 'u8[16384]{0}', space=vmem, size = 0x4000, scoped, tag = 'input window, operand 1']
    #allocation6 [shape = 's32[2]{0}', space=sflag, size = 0x8, scoped, tag = 'scoped memory for tpu_custom_call.1']
    #allocation7 [shape = 'u8[16384]{0}', space=vmem, size = 0x4000, scoped, tag = 'output window, operand 0']
    %7 = vsyncpa [#allocation3], 0
    %s8 = scalar_lea.sflag [#allocation3], 1
    %9 = vsyncpa %s8, 0
    %10 = vsyncpa [#allocation6], 0
    %s11 = scalar_lea.sflag [#allocation6], 1
    %12 = vsyncpa %s11, 0
    %13 = vsyncpa [#allocation4], 0
    %s14 = scalar_lea.sflag [#allocation4], 1
    %15 = vsyncpa %s14, 0
    loop: start=0, step=1, limit=4
    $region2: #{tpu_custom_call.1} parent=1 // loop_pre_header
      _
    $region3: #{tpu_custom_call.1} parent=1 // loop_header
      %s17 = sphi 0, %s21
      %p18 = scmp.ge.s32.totalorder %s17, 4
      %s24 = sphi 0, %s36
      %s25 = sphi 0, %s32
      %s26 = sphi 0, %s24
      %s27 = sphi 0, %s25
      %s28 = sphi 0, %s26
      %s29 = sphi 0, %s27
      %s45 = sphi 0, %s47
      %s48 = sphi 0, %s45
      %s49 = sphi 0, %s48
      %s65 = sphi 0, %s49
      %s77 = sphi 0, %s79
      %s80 = sphi 0, %s77
      %s81 = sphi 0, %s80
      %s97 = sphi 0, %s81
      %s103 = sphi 0, %s105
      %s106 = sphi 0, %s103
      %s107 = sphi 0, %s106
      %s123 = sphi 0, %s107
    $region4: #{tpu_custom_call.1} parent=1 // loop_header_branch
      %20 = sbr.rel (%p18) target = $region8
    $region5: #{tpu_custom_call.1} parent=1 // loop_body
      %s22 = ssub.s32 %s17, 1
      %s23 = ssub.s32 %s17, 2
      %s30 = sadd.s32 1, %s25
      %p31 = scmp.ge.s32.totalorder %s30, 1
      %s32 = scalar_select %p31, 0, %s30
      %s33 = sadd.s32 1, %s24
      %s34 = scalar_select %p31, %s33, %s24
      %p35 = scmp.ge.s32.totalorder %s34, 2
      %s36 = scalar_select %p35, 0, %s34
      %s37 = sadd.s32 %s24, %s25
      %p38 = scmp.lt.s32.totalorder %s37, 0
      %s39 = scalar_select %p38, %s37, 0
      %s40 = sadd.s32 %s36, %s32
      %p41 = scmp.lt.s32.totalorder %s40, 0
      %s42 = scalar_select %p41, %s40, 0
      %s43 = ssub.s32 %s39, %s42
      %p44 = scmp.eq.s32.totalorder %s43, 0
      %s46 = sadd.s32 %s45, 1
      %s47 = scalar_select %p44, %s45, %s46
      %p50 = pneg %p44
      %p51 = scmp.eq.s32.totalorder %s17, 1
      %p52 = por %p50, %p51
      %p53 = scmp.ne.s32.totalorder %s45, %s48
      %p54 = scmp.eq.s32.totalorder %s17, 0
      %p55 = por %p53, %p54
      %p56 = scmp.ne.s32.totalorder %s45, %s48
      %p57 = scmp.eq.s32.totalorder %s22, 1
      %p58 = por %p56, %p57
      %p59 = scmp.ne.s32.totalorder %s48, %s49
      %p60 = scmp.eq.s32.totalorder %s22, 0
      %p61 = por %p59, %p60
      %p62 = scmp.ne.s32.totalorder %s48, %s49
      %p63 = scmp.eq.s32.totalorder %s23, 1
      %p64 = por %p62, %p63
      %p66 = scmp.ne.s32.totalorder %s49, %s65
      %p67 = scmp.eq.s32.totalorder %s23, 0
      %p68 = por %p66, %p67
      %s69 = sadd.s32 %s24, %s25
      %p70 = scmp.lt.s32.totalorder %s69, 0
      %s71 = scalar_select %p70, %s69, 0
      %s72 = sadd.s32 %s36, %s32
      %p73 = scmp.lt.s32.totalorder %s72, 0
      %s74 = scalar_select %p73, %s72, 0
      %s75 = ssub.s32 %s71, %s74
      %p76 = scmp.eq.s32.totalorder %s75, 0
      %s78 = sadd.s32 %s77, 1
      %s79 = scalar_select %p76, %s77, %s78
      %p82 = pneg %p76
      %p83 = scmp.eq.s32.totalorder %s17, 1
      %p84 = por %p82, %p83
      %p85 = scmp.ne.s32.totalorder %s77, %s80
      %p86 = scmp.eq.s32.totalorder %s17, 0
      %p87 = por %p85, %p86
      %p88 = scmp.ne.s32.totalorder %s77, %s80
      %p89 = scmp.eq.s32.totalorder %s22, 1
      %p90 = por %p88, %p89
      %p91 = scmp.ne.s32.totalorder %s80, %s81
      %p92 = scmp.eq.s32.totalorder %s22, 0
      %p93 = por %p91, %p92
      %p94 = scmp.ne.s32.totalorder %s80, %s81
      %p95 = scmp.eq.s32.totalorder %s23, 1
      %p96 = por %p94, %p95
      %p98 = scmp.ne.s32.totalorder %s81, %s97
      %p99 = scmp.eq.s32.totalorder %s23, 0
      %p100 = por %p98, %p99
      %s101 = ssub.s32 %s24, %s36
      %p102 = scmp.eq.s32.totalorder %s101, 0
      %s104 = sadd.s32 %s103, 1
      %s105 = scalar_select %p102, %s103, %s104
      %p108 = pneg %p102
      %p109 = scmp.eq.s32.totalorder %s17, 1
      %p110 = por %p108, %p109
      %p111 = scmp.ne.s32.totalorder %s103, %s106
      %p112 = scmp.eq.s32.totalorder %s17, 0
      %p113 = por %p111, %p112
      %p114 = scmp.ne.s32.totalorder %s103, %s106
      %p115 = scmp.eq.s32.totalorder %s22, 1
      %p116 = por %p114, %p115
      %p117 = scmp.ne.s32.totalorder %s106, %s107
      %p118 = scmp.eq.s32.totalorder %s22, 0
      %p119 = por %p117, %p118
      %p120 = scmp.ne.s32.totalorder %s106, %s107
      %p121 = scmp.eq.s32.totalorder %s23, 1
      %p122 = por %p120, %p121
      %p124 = scmp.ne.s32.totalorder %s107, %s123
      %p125 = scmp.eq.s32.totalorder %s23, 0
      %p126 = por %p124, %p125
      %p127 = scmp.le.s32.totalorder 1, %s17
      %p128 = scmp.lt.s32.totalorder %s17, 3
      %p129 = pnand %p127, %p128
      %p130 = pneg %p129
      // Predicated region
      $region9: #{tpu_custom_call.1} parent=5 // pred_check
        _
      $region10: #{tpu_custom_call.1} parent=5 // pred_check_branch
        %132 = sbr.rel (%p129) target = $region12
      $region11: #{tpu_custom_call.1} parent=5 // pred_region
        %s133 = ssub.s32 %s17, 1
      $region12: #{tpu_custom_call.1} parent=5 // pred_fallthru
        _
      %p134 = scmp.lt.s32.totalorder %s17, 2
      // Predicated region
      $region13: #{tpu_custom_call.1} parent=5 // pred_check
        %p135 = pneg %p134
      $region14: #{tpu_custom_call.1} parent=5 // pred_check_branch
        %137 = sbr.rel (%p135) target = $region16
      $region15: #{tpu_custom_call.1} parent=5 // pred_region
        // Predicated region
        $region17: #{tpu_custom_call.1} parent=15 // pred_check
          %p138 = pneg %p55
        $region18: #{tpu_custom_call.1} parent=15 // pred_check_branch
          %140 = sbr.rel (%p138) target = $region20
        $region19: #{tpu_custom_call.1} parent=15 // pred_region
          %s141 = sand.u32 %s45, 1
          %s142 = scalar_lea.sflag [#allocation3], %s141
          %s143 = sand.u32 %s45, 1
          %s144 = smul.addr %s143, 16
          %s145 = scalar_lea.vmem [#allocation2], %s144
          %s146 = sadd.s32 %s24, %s25
          %p147 = scmp.lt.s32.totalorder %s146, 0
          %s148 = scalar_select %p147, %s146, 0
          %s149 = smul.u32 2, %s148
          %s151 = ssub.s32 256, 256
          %152 = vsyncadd %s142, %s151
          %s153 = smul.addr %s149, 128
          %s154 = scalar_lea.hbm %s0, %s153
          %s155 = sshll.u32 %s145, 4
          %s156 = int_to_ptr.vmem [resolvable:$true] %s155
          %161 = dma.hbm_to_vmem [thread:$0]  %s154, 256, %s156, %s142, 128, 128, 8
        $region20: #{tpu_custom_call.1} parent=15 // pred_fallthru
          _
        // Predicated region
        $region21: #{tpu_custom_call.1} parent=15 // pred_check
          %p162 = pneg %p87
        $region22: #{tpu_custom_call.1} parent=15 // pred_check_branch
          %164 = sbr.rel (%p162) target = $region24
        $region23: #{tpu_custom_call.1} parent=15 // pred_region
          %s165 = sand.u32 %s77, 1
          %s166 = scalar_lea.sflag [#allocation6], %s165
          %s167 = sand.u32 %s77, 1
          %s168 = smul.addr %s167, 16
          %s169 = scalar_lea.vmem [#allocation5], %s168
          %s170 = sadd.s32 %s24, %s25
          %p171 = scmp.lt.s32.totalorder %s170, 0
          %s172 = scalar_select %p171, %s170, 0
          %s173 = smul.u32 2, %s172
          %s175 = ssub.s32 256, 256
          %176 = vsyncadd %s166, %s175
          %s177 = smul.addr %s173, 128
          %s178 = scalar_lea.hbm %s1, %s177
          %s179 = sshll.u32 %s169, 4
          %s180 = int_to_ptr.vmem [resolvable:$true] %s179
          %185 = dma.hbm_to_vmem [thread:$0]  %s178, 256, %s180, %s166, 128, 128, 8
        $region24: #{tpu_custom_call.1} parent=15 // pred_fallthru
          _
      $region16: #{tpu_custom_call.1} parent=5 // pred_fallthru
        _
      %p186 = scmp.le.s32.totalorder 1, %s17
      %p187 = scmp.lt.s32.totalorder %s17, 3
      %p188 = pnand %p186, %p187
      %p189 = pneg %p188
      // Predicated region
      $region25: #{tpu_custom_call.1} parent=5 // pred_check
        _
      $region26: #{tpu_custom_call.1} parent=5 // pred_check_branch
        %191 = sbr.rel (%p188) target = $region28
      $region27: #{tpu_custom_call.1} parent=5 // pred_region
        %s192 = ssub.s32 %s17, 1
        %s193 = sand.u32 %s48, 1
        %s194 = scalar_lea.sflag [#allocation3], %s193
        %s195 = sand.u32 %s48, 1
        %s196 = smul.addr %s195, 16
        %s197 = scalar_lea.vmem [#allocation2], %s196
        // Predicated region
        $region29: #{tpu_custom_call.1} parent=27 // pred_check
          %p198 = pneg %p61
        $region30: #{tpu_custom_call.1} parent=27 // pred_check_branch
          %200 = sbr.rel (%p198) target = $region32
        $region31: #{tpu_custom_call.1} parent=27 // pred_region
          %201 = dma.done %s194, 256
        $region32: #{tpu_custom_call.1} parent=27 // pred_fallthru
          _
        %s202 = sand.u32 %s80, 1
        %s203 = scalar_lea.sflag [#allocation6], %s202
        %s204 = sand.u32 %s80, 1
        %s205 = smul.addr %s204, 16
        %s206 = scalar_lea.vmem [#allocation5], %s205
        // Predicated region
        $region33: #{tpu_custom_call.1} parent=27 // pred_check
          %p207 = pneg %p93
        $region34: #{tpu_custom_call.1} parent=27 // pred_check_branch
          %209 = sbr.rel (%p207) target = $region36
        $region35: #{tpu_custom_call.1} parent=27 // pred_region
          %210 = dma.done %s203, 256
        $region36: #{tpu_custom_call.1} parent=27 // pred_fallthru
          _
        %s211 = sand.u32 %s48, 1
        %s212 = scalar_lea.sflag [#allocation3], %s211
        %s213 = sand.u32 %s48, 1
        %s214 = smul.addr %s213, 16
        %s215 = scalar_lea.vmem [#allocation2], %s214
        %p216 = pneg %p61
        %p217 = pneg %p58
        %s218 = sand.u32 %s80, 1
        %s219 = scalar_lea.sflag [#allocation6], %s218
        %s220 = sand.u32 %s80, 1
        %s221 = smul.addr %s220, 16
        %s222 = scalar_lea.vmem [#allocation5], %s221
        %p223 = pneg %p93
        %p224 = pneg %p90
        %p225 = pneg %p119
        %p226 = pneg %p116
        %s227 = sand.u32 %s106, 1
        %s228 = scalar_lea.sflag [#allocation4], %s227
        %s229 = sand.u32 %s106, 1
        %s230 = smul.addr %s229, 16
        %s231 = scalar_lea.vmem [#allocation7], %s230
        %s232 = sadd.s32 %s26, %s27
        %p233 = scmp.lt.s32.totalorder %s232, 0
        %s234 = scalar_select %p233, %s232, 0
        %s235 = smul.u32 2, %s234
        %s236 = sadd.s32 %s26, %s27
        %p237 = scmp.lt.s32.totalorder %s236, 0
        %s238 = scalar_select %p237, %s236, 0
        %s239 = smul.u32 2, %s238
        %p240 = scmp.eq.s32.totalorder %s27, 0
        // Predicated region
        $region37: #{tpu_custom_call.1} parent=27 // pred_check
          %p241 = pneg %p240
        $region38: #{tpu_custom_call.1} parent=27 // pred_check_branch
          %243 = sbr.rel (%p241) target = $region40
        $region39: #{tpu_custom_call.1} parent=27 // pred_region
          %244 = vst [vmem:[%s231] sm:$0xff] 0.0
          %245 = vst [vmem:[%s231 + $0x8] sm:$0xff] 0.0
        $region40: #{tpu_custom_call.1} parent=27 // pred_fallthru
          _
        %v246 = vld [vmem:[%s197] sm:$0xff]
        %v247 = vld [vmem:[%s197 + $0x8] sm:$0xff]
        %v248 = vld [vmem:[%s206] sm:$0xff]
        %v249 = vld [vmem:[%s206 + $0x8] sm:$0xff]
        %v250 = vsub.f32 %v246, %v248
        %v251 = vsub.f32 %v247, %v249
        %v252 = vmul.f32 %v250, %v250
        %v253 = vmul.f32 %v251, %v251
        %s254 = sadd.s32 %s26, %s27
        %s255 = smul.u32 %s254, 16
        %v256 = vlaneseq
        %v257 = vshrl.u32 %v256, 7
        %v258 = vadd.s32 %v257, 8
        %v259 = vstv %s255
        %v260 = vadd.s32 %v259, %v257
        %v261 = vadd.s32 %v259, %v258
        %vm262 = vcmp.lt.s32.totalorder %v260, 16
        %vm263 = vcmp.lt.s32.totalorder %v261, 16
        %v264 = vsel %vm262, 1, 0
        %v265 = vsel %vm263, 1, 0
        %vm266 = vcmp.eq.s32.totalorder %v264, 1
        %vm267 = vcmp.eq.s32.totalorder %v265, 1
        %v268 = vsel %vm266, %v252, 0.0
        %v269 = vsel %vm267, %v253, 0.0
        %v270 = vld [vmem:[%s231] sm:$0xff]
        %v271 = vld [vmem:[%s231 + $0x8] sm:$0xff]
        %v272 = vadd.f32 %v268, 0.0
        %v273 = vadd.f32 %v269, 0.0
        %v274 = vadd.f32 %v270, %v272
        %v275 = vadd.f32 %v271, %v273
        %276 = vst [vmem:[%s231] sm:$0xff] %v274
        %277 = vst [vmem:[%s231 + $0x8] sm:$0xff] %v275
        %s278 = sand.u32 %s106, 1
        %s279 = scalar_lea.sflag [#allocation4], %s278
        %s280 = sand.u32 %s106, 1
        %s281 = smul.addr %s280, 16
        %s282 = scalar_lea.vmem [#allocation7], %s281
        // Predicated region
        $region41: #{tpu_custom_call.1} parent=27 // pred_check
          %p283 = pneg %p116
        $region42: #{tpu_custom_call.1} parent=27 // pred_check_branch
          %285 = sbr.rel (%p283) target = $region44
        $region43: #{tpu_custom_call.1} parent=27 // pred_region
          %s287 = ssub.s32 256, 256
          %288 = vsyncadd %s279, %s287
          %s289 = smul.addr %s26, 2
          %s290 = smul.addr %s289, 128
          %s291 = scalar_lea.hbm %s2, %s290
          %s292 = sshll.u32 %s282, 4
          %s293 = int_to_ptr.vmem [resolvable:$true] %s292
          %298 = dma.vmem_to_hbm [thread:$0]  %s293, 256, %s291, %s279, 128, 128, 8
        $region44: #{tpu_custom_call.1} parent=27 // pred_fallthru
          _
      $region28: #{tpu_custom_call.1} parent=5 // pred_fallthru
        _
      %p299 = scmp.le.s32.totalorder 2, %s17
      // Predicated region
      $region45: #{tpu_custom_call.1} parent=5 // pred_check
        %p300 = pneg %p299
      $region46: #{tpu_custom_call.1} parent=5 // pred_check_branch
        %302 = sbr.rel (%p300) target = $region48
      $region47: #{tpu_custom_call.1} parent=5 // pred_region
        %s303 = ssub.s32 %s17, 2
        // Predicated region
        $region49: #{tpu_custom_call.1} parent=47 // pred_check
          %p304 = pneg %p122
        $region50: #{tpu_custom_call.1} parent=47 // pred_check_branch
          %306 = sbr.rel (%p304) target = $region52
        $region51: #{tpu_custom_call.1} parent=47 // pred_region
          %s307 = sand.u32 %s107, 1
          %s308 = scalar_lea.sflag [#allocation4], %s307
          %s309 = sand.u32 %s107, 1
          %s310 = smul.addr %s309, 16
          %s311 = scalar_lea.vmem [#allocation7], %s310
          %312 = dma.done %s308, 256
        $region52: #{tpu_custom_call.1} parent=47 // pred_fallthru
          _
      $region48: #{tpu_custom_call.1} parent=5 // pred_fallthru
        _
    $region6: #{tpu_custom_call.1} parent=1 // loop_footer
      %s21 = sadd.s32 1, %s17
    $region7: #{tpu_custom_call.1} parent=1 // loop_footer_branch
      %16 = sbr.rel target = $region3
    $region8: #{tpu_custom_call.1} parent=1 // loop_exit
      _
    %313 = vsyncpa [#allocation3], 1
    %s314 = scalar_lea.sflag [#allocation3], 1
    %315 = vsyncpa %s314, 1
    %316 = vsyncpa [#allocation6], 1
    %s317 = scalar_lea.sflag [#allocation6], 1
    %318 = vsyncpa %s317, 1
    %319 = vsyncpa [#allocation4], 1
    %s320 = scalar_lea.sflag [#allocation4], 1
    %321 = vsyncpa %s320, 1

</llo_original>
